<compile_context>
chip_gen: v7x
topology: tpu7x:2x2x1
jax: 0.10.0
libtpu: 0.0.40
codegen_flags: <defaults>
</compile_context>

<pallas_src>
import jax
import jax.numpy as jnp
from jax.experimental import pallas as pl
from jax.experimental.pallas import tpu as pltpu

_VMEM_LIMIT = 32 * 1024 * 1024  # conservative: fits v5e/v6e/v7x scoped VMEM


def _round_up(x, m):
    return ((x + m - 1) // m) * m


def _pick_tile(n, max_tile):
    """Row tile: multiple of 16 (bf16 sublane packing), as large as possible
    (mem-bound roofline), with zero-pad waste kept <= ~12.5% of n."""
    n16 = _round_up(n, 16)
    if n16 <= max_tile:
        return n16
    for t in (1024, 512, 256, 128, 64, 32, 16):
        if t <= max_tile and (_round_up(n, t) - n) * 8 <= n:
            return t
    return 16


# ----------------------------------------------------------------------
# Fused kernel: patch-embed + CLS-drop + AdaptiveAvgPool1d(1) partial sums
#   part[b, o, :, :] = sum over the o-th group of patch tiles of
#                      reshape(patches_tile @ W, (tn//8, 8, Dp)).sum(0)
# (CLS never enters the pool, so it is simply not computed here.)
# ----------------------------------------------------------------------
def fused_embed_pool(patches, w_pad, n_outer, n_inner, tn):
    B, N_pad, Kp = patches.shape
    Dp = w_pad.shape[1]

    def kernel(x_ref, w_ref, o_ref):
        i = pl.program_id(2)

        @pl.when(i == 0)
        def _():
            o_ref[...] = jnp.zeros_like(o_ref)

        # bf16 x bf16 -> f32 on the MXU; (tn, Kp) @ (Kp, Dp) -> (tn, Dp)
        toks = jnp.dot(x_ref[...], w_ref[...],
                       preferred_element_type=jnp.float32)
        # Fold tn rows into the dense (8, Dp) accumulator with plain VPU vreg
        # adds (no per-step XLU cross-sublane reduce; the 8->1 reduce, 1/N and
        # +bias happen in the tiny host-side combine).
        o_ref[...] += toks.reshape(tn // 8, 8, Dp).sum(axis=0)

    flops = 2 * B * N_pad * Kp * Dp
    bytes_accessed = (B * N_pad * Kp * 2 + Kp * Dp * 2
                      + B * n_outer * 8 * Dp * 4)

    # NOTE(v7x): W/bias double-buffering could be pinned to a single buffer
    # (pipeline_mode=pl.Buffered(1)) to save VMEM at realistic sizes; omitted
    # here to keep lowering maximally portable (weights are tiny at this size).
    return pl.pallas_call(
        kernel,
        out_shape=jax.ShapeDtypeStruct((B, n_outer, 8, Dp), jnp.float32),
        grid_spec=pltpu.PrefetchScalarGridSpec(
            num_scalar_prefetch=0,
            grid=(B, n_outer, n_inner),
            in_specs=[
                pl.BlockSpec((pl.Squeezed(), tn, Kp),
                             lambda b, o, i: (b, o * n_inner + i, 0)),
                pl.BlockSpec((Kp, Dp), lambda b, o, i: (0, 0)),  # W resident
            ],
            out_specs=pl.BlockSpec((pl.Squeezed(), pl.Squeezed(), 8, Dp),
                                   lambda b, o, i: (b, o, 0, 0)),
        ),
        compiler_params=pltpu.CompilerParams(
            dimension_semantics=("parallel", "parallel", "arbitrary"),
            vmem_limit_bytes=_VMEM_LIMIT,
        ),
        cost_estimate=pl.CostEstimate(flops=flops, transcendentals=0,
                                      bytes_accessed=bytes_accessed),
    )(patches, w_pad)


# ----------------------------------------------------------------------
# Tiled patch-embed kernel (used by forward() to produce token embeddings).
# Output last dim is the REAL embed_dim (no padded-f32 writeback + slice).
# ----------------------------------------------------------------------
def patch_embed(patches_flat, w, b, tm):
    Mp, Kp = patches_flat.shape
    D = w.shape[1]

    def kernel(x_ref, w_ref, b_ref, o_ref):
        acc = jnp.dot(x_ref[...], w_ref[...],
                      preferred_element_type=jnp.float32)
        o_ref[...] = (acc + b_ref[...]).astype(o_ref.dtype)

    flops = 2 * Mp * Kp * D
    bytes_accessed = Mp * Kp * 2 + Kp * D * 2 + D * 4 + Mp * D * 4

    return pl.pallas_call(
        kernel,
        out_shape=jax.ShapeDtypeStruct((Mp, D), jnp.float32),
        grid_spec=pltpu.PrefetchScalarGridSpec(
            num_scalar_prefetch=0,
            grid=(Mp // tm,),
            in_specs=[
                pl.BlockSpec((tm, Kp), lambda i: (i, 0)),
                pl.BlockSpec((Kp, D), lambda i: (0, 0)),   # W resident
                pl.BlockSpec((1, D), lambda i: (0, 0)),    # bias resident
            ],
            out_specs=pl.BlockSpec((tm, D), lambda i: (i, 0)),
        ),
        compiler_params=pltpu.CompilerParams(
            dimension_semantics=("parallel",),
            vmem_limit_bytes=_VMEM_LIMIT,
        ),
        cost_estimate=pl.CostEstimate(flops=flops, transcendentals=0,
                                      bytes_accessed=bytes_accessed),
    )(patches_flat, w, b)


# ----------------------------------------------------------------------
# Wrapper (glue in plain JAX)
# ----------------------------------------------------------------------
class DinoV2WrapperPallas:
    def __init__(self, key, in_chans=4, patch=8, embed_dim=32):
        kw, kb, kc = jax.random.split(key, 3)
        self.patch = patch
        self.in_chans = in_chans
        self.embed_dim = embed_dim
        K = in_chans * patch * patch
        self.K = K
        self.K_pad = _round_up(K, 128)
        self.D_pad = _round_up(embed_dim, 128)

        # deterministic synthetic parameters (stand-in for DINOv2 weights)
        self.w = jax.random.normal(kw, (K, embed_dim), jnp.float32) * 0.02
        self.b = jax.random.normal(kb, (1, embed_dim), jnp.float32) * 0.02
        self.cls = jax.random.normal(kc, (1, 1, embed_dim), jnp.float32) * 0.02

        # bf16 MXU-side weights:
        #  * w_pool: K/D zero-padded to 128 -> lane/sublane-dense accumulate.
        #  * w_tok : unpadded D so forward() only writes the real D columns.
        w_pool = jnp.zeros((self.K_pad, self.D_pad), jnp.float32)
        self.w_pool = w_pool.at[:K, :embed_dim].set(self.w).astype(jnp.bfloat16)
        w_tok = jnp.zeros((self.K_pad, embed_dim), jnp.float32)
        self.w_tok = w_tok.at[:K, :].set(self.w).astype(jnp.bfloat16)

    # --- patch extraction: single fused relayout pass -------------------
    def _patch_rows(self, x):
        """NCHW image -> [B, N, K] bf16 patch rows.

        Emitted as one jitted expression (transpose+reshape+cast) so XLA fuses
        it into a single pass that writes bf16 directly; the kernels read it
        exactly once.
        # TODO(synk): driving the BlockSpec index_map over raw NCHW (in-kernel
        # (C,p,W)->(nw,K) rearrange) would remove this pass too, but the
        # in-kernel shuffle costs XLU/relayout slots; kept as one XLA pass.
        """
        B, C, H, W = x.shape
        p = self.patch
        assert H % p == 0 and W % p == 0
        nh, nw = H // p, W // p
        t = x.reshape(B, C, nh, p, nw, p)
        t = jnp.transpose(t, (0, 2, 4, 1, 3, 5))        # [B, nh, nw, C, p, p]
        return t.reshape(B, nh * nw, C * p * p).astype(jnp.bfloat16)

    # --- base_model(x): token embeddings [B, 1+N, D] --------------------
    def forward(self, x):
        B = x.shape[0]
        rows = self._patch_rows(x)                       # [B, N, K] bf16
        N = rows.shape[1]
        M = B * N
        tm = _pick_tile(M, max_tile=1024)
        M_pad = _round_up(M, tm)
        flat = rows.reshape(M, self.K)
        flat = jnp.pad(flat, ((0, M_pad - M), (0, self.K_pad - self.K)))
        tok = patch_embed(flat, self.w_tok, self.b, tm)[:M]   # [M, D] f32
        tok = tok.reshape(B, N, self.embed_dim)
        cls = jnp.broadcast_to(self.cls, (B, 1, self.embed_dim))
        return jnp.concatenate([cls, tok], axis=1)             # [B, 1+N, D]

    # --- DinoV2Wrapper.forward_features -------------------------------
    def forward_features(self, x):
        # Fused path: drop-CLS + AdaptiveAvgPool1d(1) computed inside the
        # patch-embed kernel; the [B, 1+N, D] token tensor is never built.
        # (Our synthetic base_model always yields 3-D tokens with 1+N > 1, so
        # this is exactly the first branch of the reference forward_features.)
        B = x.shape[0]
        rows = self._patch_rows(x)                       # [B, N, K] bf16
        N = rows.shape[1]
        tn = _pick_tile(N, max_tile=512)
        N_pad = _round_up(N, tn)                         # zero rows sum to 0
        nn = N_pad // tn
        n_outer = 2 if (nn % 2 == 0 and nn >= 2) else 1  # dual-TC friendly
        n_inner = nn // n_outer
        rows = jnp.pad(rows, ((0, 0), (0, N_pad - N), (0, self.K_pad - self.K)))
        part = fused_embed_pool(rows, self.w_pool, n_outer, n_inner, tn)
        # tiny combine: outer tiles + 8 accumulator rows, mean, +bias, un-pad D
        feats = part.sum(axis=(1, 2))[:, : self.embed_dim] * (1.0 / N) + self.b
        return feats                                     # [B, D] f32


if __name__ == "__main__":
    key = jax.random.PRNGKey(0)
    k_param, k_x = jax.random.split(key)

    B, C, H, W = 2, 4, 16, 16
    model = DinoV2WrapperPallas(k_param, in_chans=C, patch=8, embed_dim=32)
    x = jax.random.normal(k_x, (B, C, H, W), jnp.float32)

    ff = jax.jit(model.forward_features)
    fw = jax.jit(model.forward)
    feats = jax.block_until_ready(ff(x))                 # [B, D]
    toks = jax.block_until_ready(fw(x))                  # [B, 1+N, D]

    # pure-JAX reference (same bf16-cast operands; bf16 products exact in f32)
    p = model.patch
    nh, nw = H // p, W // p
    patches_ref = jnp.transpose(
        x.reshape(B, C, nh, p, nw, p), (0, 2, 4, 1, 3, 5)
    ).reshape(B, nh * nw, C * p * p)
    patches_ref = patches_ref.astype(jnp.bfloat16).astype(jnp.float32)
    w_ref = model.w.astype(jnp.bfloat16).astype(jnp.float32)
    tok_ref = patches_ref @ w_ref + model.b                      # [B, N, D]
    cls_ref = jnp.broadcast_to(model.cls, (B, 1, model.embed_dim))
    tok_full_ref = jnp.concatenate([cls_ref, tok_ref], axis=1)   # [B, 1+N, D]
    feat_ref = jnp.mean(tok_full_ref[:, 1:, :], axis=1)          # [B, D]

    assert feats.shape == (B, model.embed_dim)
    assert jnp.allclose(feats, feat_ref, atol=1e-5, rtol=1e-4), float(
        jnp.max(jnp.abs(feats - feat_ref)))
    assert toks.shape == tok_full_ref.shape
    assert jnp.allclose(toks, tok_full_ref, atol=1e-5, rtol=1e-4), float(
        jnp.max(jnp.abs(toks - tok_full_ref)))

    print("KERNEL_OK")
</pallas_src>

<mosaic_0001>
module attributes {stable_mosaic.version = 11 : i64} {
  func.func @kernel(%arg0: i32, %arg1: i32, %arg2: i32, %arg3: memref<1x16x256xbf16, #tpu.memory_space<vmem>>, %arg4: memref<256x128xbf16, #tpu.memory_space<vmem>>, %arg5: memref<1x1x8x128xf32, #tpu.memory_space<vmem>>) attributes {dimension_semantics = [#tpu.dimension_semantics<parallel>, #tpu.dimension_semantics<parallel>, #tpu.dimension_semantics<arbitrary>], iteration_bounds = array<i64: 2, 1, 1>, scalar_prefetch = 0 : i64, scratch_operands = 0 : i64, tpu.core_type = #tpu.core_type<tc>, window_params = [{transform_indices = @transform_0, window_bounds = array<i64: 1, 16, 256>}, {pipeline_mode = #tpu.pipeline_mode<synchronous>, transform_indices = @transform_1, window_bounds = array<i64: 256, 128>}, {transform_indices = @transform_2, window_bounds = array<i64: 1, 1, 8, 128>}]} {
    %c0_i32 = arith.constant 0 : i32
    %0 = arith.cmpi eq, %arg2, %c0_i32 : i32
    %1 = arith.extui %0 : i1 to i32
    %c0_i32_0 = arith.constant 0 : i32
    %2 = arith.cmpi ne, %1, %c0_i32_0 : i32
    scf.if %2 {
      %cst_14 = arith.constant 0.000000e+00 : f32
      %15 = vector.broadcast %cst_14 : f32 to vector<8x128xf32>
      %c0_15 = arith.constant 0 : index
      %c0_16 = arith.constant 0 : index
      %c0_17 = arith.constant 0 : index
      %c0_18 = arith.constant 0 : index
      %16 = vector.load %arg5[%c0_15, %c0_16, %c0_17, %c0_18] : memref<1x1x8x128xf32, #tpu.memory_space<vmem>>, vector<1x1x8x128xf32>
      %17 = vector.shape_cast %16 : vector<1x1x8x128xf32> to vector<8x128xf32>
      %18 = vector.shape_cast %15 : vector<8x128xf32> to vector<1x1x8x128xf32>
      tpu.vector_store %arg5[%c0_15, %c0_16, %c0_17, %c0_18], %18 {strides = array<i32>} : memref<1x1x8x128xf32, #tpu.memory_space<vmem>>, vector<1x1x8x128xf32>,
    } else {
    }
    %c0 = arith.constant 0 : index
    %c0_1 = arith.constant 0 : index
    %c0_2 = arith.constant 0 : index
    %3 = vector.load %arg3[%c0, %c0_1, %c0_2] : memref<1x16x256xbf16, #tpu.memory_space<vmem>>, vector<1x16x256xbf16>
    %4 = vector.shape_cast %3 : vector<1x16x256xbf16> to vector<16x256xbf16>
    %c0_3 = arith.constant 0 : index
    %c0_4 = arith.constant 0 : index
    %5 = vector.load %arg4[%c0_3, %c0_4] : memref<256x128xbf16, #tpu.memory_space<vmem>>, vector<256x128xbf16>
    %cst = arith.constant dense<0.000000e+00> : vector<16x128xf32>
    %6 = tpu.matmul %4, %5, %cst {dimension_numbers = #tpu.dot_dimension_numbers<[1], [0], [0], [1], [0, 0, 1, 1], [], []>} : vector<16x256xbf16>, vector<256x128xbf16>, vector<16x128xf32> -> vector<16x128xf32>
    %c0_5 = arith.constant 0 : index
    %c0_6 = arith.constant 0 : index
    %c0_7 = arith.constant 0 : index
    %c0_8 = arith.constant 0 : index
    %7 = vector.load %arg5[%c0_5, %c0_6, %c0_7, %c0_8] : memref<1x1x8x128xf32, #tpu.memory_space<vmem>>, vector<1x1x8x128xf32>
    %8 = vector.shape_cast %7 : vector<1x1x8x128xf32> to vector<8x128xf32>
    %9 = vector.shape_cast %6 : vector<16x128xf32> to vector<2x8x128xf32>
    %cst_9 = arith.constant dense<0.000000e+00> : vector<8x128xf32>
    %10 = vector.multi_reduction <add>, %9, %cst_9 [0] : vector<2x8x128xf32> to vector<8x128xf32>
    %11 = arith.addf %8, %10 : vector<8x128xf32>
    %c0_10 = arith.constant 0 : index
    %c0_11 = arith.constant 0 : index
    %c0_12 = arith.constant 0 : index
    %c0_13 = arith.constant 0 : index
    %12 = vector.load %arg5[%c0_10, %c0_11, %c0_12, %c0_13] : memref<1x1x8x128xf32, #tpu.memory_space<vmem>>, vector<1x1x8x128xf32>
    %13 = vector.shape_cast %12 : vector<1x1x8x128xf32> to vector<8x128xf32>
    %14 = vector.shape_cast %11 : vector<8x128xf32> to vector<1x1x8x128xf32>
    tpu.vector_store %arg5[%c0_10, %c0_11, %c0_12, %c0_13], %14 {strides = array<i32>} : memref<1x1x8x128xf32, #tpu.memory_space<vmem>>, vector<1x1x8x128xf32>,
    return
  }
  func.func @transform_0(%arg0: i32, %arg1: i32, %arg2: i32) -> (i32, i32, i32) {
    %c1_i32 = arith.constant 1 : i32
    %0 = arith.muli %arg1, %c1_i32 : i32
    %1 = arith.addi %0, %arg2 : i32
    %c0_i32 = arith.constant 0 : i32
    %c0_i32_0 = arith.constant 0 : i32
    return %arg0, %1, %c0_i32 : i32, i32, i32
  }
  func.func @transform_1(%arg0: i32, %arg1: i32, %arg2: i32) -> (i32, i32) {
    %c0_i32 = arith.constant 0 : i32
    %c0_i32_0 = arith.constant 0 : i32
    %c0_i32_1 = arith.constant 0 : i32
    return %c0_i32, %c0_i32_0 : i32, i32
  }
  func.func @transform_2(%arg0: i32, %arg1: i32, %arg2: i32) -> (i32, i32, i32, i32) {
    %c0_i32 = arith.constant 0 : i32
    %c0_i32_0 = arith.constant 0 : i32
    %c0_i32_1 = arith.constant 0 : i32
    return %arg0, %arg1, %c0_i32, %c0_i32_0 : i32, i32, i32, i32
  }
}

</mosaic_0001>

<llo_original>
// kernel: forward_features.1
$region0: #{forward_features.1}
  #allocation0 [shape = 'u32[]', space=smem, size = 0x4, offset = 0x4, fixed_abs, tag = 'smem constant byte address 0x4 - core index']
  #allocation1 [shape = 'u32[144,128]{1,0:T(1,128)}', space=vmem, size = 0x12000, scoped, tag = 'internal scratch']
  %s0 = inlined_call_operand.vmem [shape: bf16[2,16,256], index: 0, kind: input, shape index: {}]
  %s1 = inlined_call_operand.vmem [shape: bf16[256,128], index: 1, kind: input, shape index: {}]
  %s2 = inlined_call_operand.vmem [shape: f32[2,1,8,128], index: 2, kind: output, shape index: {}]
  %s3 = sld [smem:[#allocation0]]
  $region45: #{forward_features.1} parent=0
    _
  %s5 = ssub.s32 1, %s3
  %s6 = scalar_select 0, %s5, %s3
  loop: start=0, step=1, limit=4
  $region2: #{forward_features.1} parent=0 // loop_pre_header
    _
  $region3: #{forward_features.1} parent=0 // loop_header
    %s8 = sphi 0, %s12
    %p9 = scmp.ge.s32.totalorder %s8, 4
    %s15 = sphi 0, %s34
    %s16 = sphi 0, %s30
    %s17 = sphi 0, %s26
    %s18 = sphi 0, %s15
    %s19 = sphi 0, %s16
    %s20 = sphi 0, %s17
    %s21 = sphi 0, %s18
    %s22 = sphi 0, %s19
    %s23 = sphi 0, %s20
    %s41 = sphi 0, %s43
    %s44 = sphi 0, %s41
    %s45 = sphi 0, %s44
    %s61 = sphi 0, %s45
    %s65 = sphi 0, %s65
    %s67 = sphi 0, %s65
    %s68 = sphi 0, %s67
    %s82 = sphi 0, %s68
    %s90 = sphi 0, %s92
    %s93 = sphi 0, %s90
    %s94 = sphi 0, %s93
    %s110 = sphi 0, %s94
  $region4: #{forward_features.1} parent=0 // loop_header_branch
    %11 = sbr.rel (%p9) target = $region8
  $region5: #{forward_features.1} parent=0 // loop_body
    %s13 = ssub.s32 %s8, 1
    %s14 = ssub.s32 %s8, 2
    %s24 = sadd.s32 1, %s17
    %p25 = scmp.ge.s32.totalorder %s24, 1
    %s26 = scalar_select %p25, 0, %s24
    %s27 = sadd.s32 1, %s16
    %s28 = scalar_select %p25, %s27, %s16
    %p29 = scmp.ge.s32.totalorder %s28, 1
    %s30 = scalar_select %p29, 0, %s28
    %s31 = sadd.s32 1, %s15
    %s32 = scalar_select %p29, %s31, %s15
    %p33 = scmp.ge.s32.totalorder %s32, 2
    %s34 = scalar_select %p33, 0, %s32
    %s35 = sadd.s32 %s16, %s17
    %s36 = sadd.s32 %s30, %s26
    %s37 = ssub.s32 %s15, %s34
    %s38 = ssub.s32 %s35, %s36
    %s39 = sor.u32 %s37, %s38
    %p40 = scmp.eq.s32.totalorder %s39, 0
    %s42 = sadd.s32 %s41, 1
    %s43 = scalar_select %p40, %s41, %s42
    %p46 = pneg %p40
    %p47 = scmp.eq.s32.totalorder %s8, 1
    %p48 = por %p46, %p47
    %p49 = scmp.ne.s32.totalorder %s41, %s44
    %p50 = scmp.eq.s32.totalorder %s8, 0
    %p51 = por %p49, %p50
    %p52 = scmp.ne.s32.totalorder %s41, %s44
    %p53 = scmp.eq.s32.totalorder %s13, 1
    %p54 = por %p52, %p53
    %p55 = scmp.ne.s32.totalorder %s44, %s45
    %p56 = scmp.eq.s32.totalorder %s13, 0
    %p57 = por %p55, %p56
    %p58 = scmp.ne.s32.totalorder %s44, %s45
    %p59 = scmp.eq.s32.totalorder %s14, 1
    %p60 = por %p58, %p59
    %p62 = scmp.ne.s32.totalorder %s45, %s61
    %p63 = scmp.eq.s32.totalorder %s14, 0
    %p64 = por %p62, %p63
    %s66 = sadd.s32 %s65, 1
    %p69 = scmp.eq.s32.totalorder %s8, 1
    %p70 = scmp.ne.s32.totalorder %s65, %s67
    %p71 = scmp.eq.s32.totalorder %s8, 0
    %p72 = por %p70, %p71
    %p73 = scmp.ne.s32.totalorder %s65, %s67
    %p74 = scmp.eq.s32.totalorder %s13, 1
    %p75 = por %p73, %p74
    %p76 = scmp.ne.s32.totalorder %s67, %s68
    %p77 = scmp.eq.s32.totalorder %s13, 0
    %p78 = por %p76, %p77
    %p79 = scmp.ne.s32.totalorder %s67, %s68
    %p80 = scmp.eq.s32.totalorder %s14, 1
    %p81 = por %p79, %p80
    %p83 = scmp.ne.s32.totalorder %s68, %s82
    %p84 = scmp.eq.s32.totalorder %s14, 0
    %p85 = por %p83, %p84
    %s86 = ssub.s32 %s15, %s34
    %s87 = ssub.s32 %s16, %s30
    %s88 = sor.u32 %s86, %s87
    %p89 = scmp.eq.s32.totalorder %s88, 0
    %s91 = sadd.s32 %s90, 1
    %s92 = scalar_select %p89, %s90, %s91
    %p95 = pneg %p89
    %p96 = scmp.eq.s32.totalorder %s8, 1
    %p97 = por %p95, %p96
    %p98 = scmp.ne.s32.totalorder %s90, %s93
    %p99 = scmp.eq.s32.totalorder %s8, 0
    %p100 = por %p98, %p99
    %p101 = scmp.ne.s32.totalorder %s90, %s93
    %p102 = scmp.eq.s32.totalorder %s13, 1
    %p103 = por %p101, %p102
    %p104 = scmp.ne.s32.totalorder %s93, %s94
    %p105 = scmp.eq.s32.totalorder %s13, 0
    %p106 = por %p104, %p105
    %p107 = scmp.ne.s32.totalorder %s93, %s94
    %p108 = scmp.eq.s32.totalorder %s14, 1
    %p109 = por %p107, %p108
    %p111 = scmp.ne.s32.totalorder %s94, %s110
    %p112 = scmp.eq.s32.totalorder %s14, 0
    %p113 = por %p111, %p112
    %p114 = scmp.le.s32.totalorder 1, %s8
    %p115 = scmp.lt.s32.totalorder %s8, 3
    %p116 = pnand %p114, %p115
    %p117 = pneg %p116
    // Predicated region
    $region9: #{forward_features.1} parent=5 // pred_check
      _
    $region10: #{forward_features.1} parent=5 // pred_check_branch
      %119 = sbr.rel (%p116) target = $region12
    $region11: #{forward_features.1} parent=5 // pred_region
      %s120 = ssub.s32 %s8, 1
      // Predicated region
      $region13: #{forward_features.1} parent=11 // pred_check
        %p121 = pneg %p78
      $region14: #{forward_features.1} parent=11 // pred_check_branch
        %123 = sbr.rel (%p121) target = $region16
      $region15: #{forward_features.1} parent=11 // pred_region
        _
      $region16: #{forward_features.1} parent=11 // pred_fallthru
        _
    $region12: #{forward_features.1} parent=5 // pred_fallthru
      _
    %p124 = scmp.lt.s32.totalorder %s8, 2
    // Predicated region
    $region17: #{forward_features.1} parent=5 // pred_check
      %p125 = pneg %p124
    $region18: #{forward_features.1} parent=5 // pred_check_branch
      %127 = sbr.rel (%p125) target = $region20
    $region19: #{forward_features.1} parent=5 // pred_region
      // Predicated region
      $region21: #{forward_features.1} parent=19 // pred_check
        %p128 = pneg %p51
      $region22: #{forward_features.1} parent=19 // pred_check_branch
        %130 = sbr.rel (%p128) target = $region24
      $region23: #{forward_features.1} parent=19 // pred_region
        %s131 = sadd.s32 %s16, %s17
        %s132 = smul.u32 2, %s131
        %p133 = scmp.lt.s32.totalorder %s15, 1
        %s134 = scalar_select %p133, %s15, 1
        %p135 = scmp.lt.s32.totalorder %s132, 1
        %s136 = scalar_select %p135, %s132, 1
        %s137 = smul.addr %s136, 2
        %s138 = smul.addr %s134, 4
        %s139 = sadd.s32 %s137, %s138
        %s140 = smul.addr %s139, 4
        %s141 = scalar_lea.vmem %s0, %s140
        %s142 = sadd.s32 %s16, %s17
        %s143 = smul.u32 2, %s142
      $region24: #{forward_features.1} parent=19 // pred_fallthru
        _
    $region20: #{forward_features.1} parent=5 // pred_fallthru
      _
    %p144 = scmp.le.s32.totalorder 1, %s8
    %p145 = scmp.lt.s32.totalorder %s8, 3
    %p146 = pnand %p144, %p145
    %p147 = pneg %p146
    // Predicated region
    $region25: #{forward_features.1} parent=5 // pred_check
      _
    $region26: #{forward_features.1} parent=5 // pred_check_branch
      %149 = sbr.rel (%p146) target = $region28
    $region27: #{forward_features.1} parent=5 // pred_region
      %s150 = ssub.s32 %s8, 1
      %s151 = sadd.s32 %s19, %s20
      %s152 = smul.u32 2, %s151
      %p153 = scmp.lt.s32.totalorder %s18, 1
      %s154 = scalar_select %p153, %s18, 1
      %p155 = scmp.lt.s32.totalorder %s152, 1
      %s156 = scalar_select %p155, %s152, 1
      %s157 = smul.addr %s156, 2
      %s158 = smul.addr %s154, 4
      %s159 = sadd.s32 %s157, %s158
      %s160 = smul.addr %s159, 4
      %s161 = scalar_lea.vmem %s0, %s160
      %p162 = pneg %p57
      %p163 = pneg %p54
      %p164 = pneg %p78
      %p165 = pneg %p75
      %p166 = pneg %p106
      %p167 = pneg %p103
      %p168 = scmp.lt.s32.totalorder %s18, 1
      %s169 = scalar_select %p168, %s18, 1
      %p170 = scmp.lt.s32.totalorder %s19, 0
      %s171 = scalar_select %p170, %s19, 0
      %s172 = sadd.s32 %s171, %s169
      %s173 = smul.addr %s172, 8
      %s174 = scalar_lea.vmem %s2, %s173
      %s175 = sadd.s32 %s19, %s20
      %s176 = smul.u32 2, %s175
      %p177 = scmp.lt.s32.totalorder %s18, 1
      %s178 = scalar_select %p177, %s18, 1
      %p179 = scmp.lt.s32.totalorder %s176, 1
      %s180 = scalar_select %p179, %s176, 1
      %s181 = smul.addr %s180, 2
      %s182 = smul.addr %s178, 4
      %s183 = sadd.s32 %s181, %s182
      %s184 = smul.addr %s183, 4
      %s185 = scalar_lea.vmem %s0, %s184
      %s186 = sadd.s32 %s19, %s20
      %s187 = smul.u32 2, %s186
      %p188 = scmp.lt.s32.totalorder %s18, 1
      %s189 = scalar_select %p188, %s18, 1
      %p190 = scmp.lt.s32.totalorder %s19, 0
      %s191 = scalar_select %p190, %s19, 0
      %s192 = sadd.s32 %s191, %s189
      %s193 = smul.addr %s192, 8
      %s194 = scalar_lea.vmem %s2, %s193
      %p196 = scmp.eq.s32.totalorder %s20, 0
      // Predicated region
      $region29: #{forward_features.1} parent=27 // pred_check
        %p197 = pneg %p196
      $region30: #{forward_features.1} parent=27 // pred_check_branch
        %199 = sbr.rel (%p197) target = $region32
      $region31: #{forward_features.1} parent=27 // pred_region
        %200 = vst [vmem:[%s194] sm:$0xff] 0.0
      $region32: #{forward_features.1} parent=27 // pred_fallthru
        _
      %v201 = vld [vmem:[%s185] sm:$0xff]
      %v202 = vld [vmem:[%s185 + $0x8] sm:$0xff]
      %v203 = vld [vmem:[%s1] sm:$0xf]
      %v204 = vld [vmem:[%s1 + $0x4] sm:$0xf]
      %v205 = vld [vmem:[%s1 + $0x8] sm:$0xf]
      %v206 = vld [vmem:[%s1 + $0xc] sm:$0xf]
      %v207 = vld [vmem:[%s1 + $0x10] sm:$0xf]
      %v208 = vld [vmem:[%s1 + $0x14] sm:$0xf]
      %v209 = vld [vmem:[%s1 + $0x18] sm:$0xf]
      %v210 = vld [vmem:[%s1 + $0x1c] sm:$0xf]
      %v211 = vld [vmem:[%s1 + $0x20] sm:$0xf]
      %v212 = vld [vmem:[%s1 + $0x24] sm:$0xf]
      %v213 = vld [vmem:[%s1 + $0x28] sm:$0xf]
      %v214 = vld [vmem:[%s1 + $0x2c] sm:$0xf]
      %v215 = vld [vmem:[%s1 + $0x30] sm:$0xf]
      %v216 = vld [vmem:[%s1 + $0x34] sm:$0xf]
      %v217 = vld [vmem:[%s1 + $0x38] sm:$0xf]
      %v218 = vld [vmem:[%s1 + $0x3c] sm:$0xf]
      %v219 = vld [vmem:[%s1 + $0x40] sm:$0xf]
      %v220 = vld [vmem:[%s1 + $0x44] sm:$0xf]
      %v221 = vld [vmem:[%s1 + $0x48] sm:$0xf]
      %v222 = vld [vmem:[%s1 + $0x4c] sm:$0xf]
      %v223 = vld [vmem:[%s1 + $0x50] sm:$0xf]
      %v224 = vld [vmem:[%s1 + $0x54] sm:$0xf]
      %v225 = vld [vmem:[%s1 + $0x58] sm:$0xf]
      %v226 = vld [vmem:[%s1 + $0x5c] sm:$0xf]
      %v227 = vld [vmem:[%s1 + $0x60] sm:$0xf]
      %v228 = vld [vmem:[%s1 + $0x64] sm:$0xf]
      %v229 = vld [vmem:[%s1 + $0x68] sm:$0xf]
      %v230 = vld [vmem:[%s1 + $0x6c] sm:$0xf]
      %v231 = vld [vmem:[%s1 + $0x70] sm:$0xf]
      %v232 = vld [vmem:[%s1 + $0x74] sm:$0xf]
      %v233 = vld [vmem:[%s1 + $0x78] sm:$0xf]
      %v234 = vld [vmem:[%s1 + $0x7c] sm:$0xf]
      %v237 = vunpack.c.l.b16 %v201
      %v238 = vunpack.c.h.b16 %v201
      %v239 = vunpack.c.l.b16 %v202
      %v240 = vunpack.c.h.b16 %v202
      %v241 = vpack.c.b16 %v239, %v237
      %v242 = vpack.c.b16 %v240, %v238
      %v277 = vunpack.c.l.b16 %v203
      %v278 = vunpack.c.l.b16 %v204
      %v279 = vunpack.c.l.b16 %v205
      %v280 = vunpack.c.l.b16 %v206
      %v281 = vunpack.c.l.b16 %v207
      %v282 = vunpack.c.l.b16 %v208
      %v283 = vunpack.c.l.b16 %v209
      %v284 = vunpack.c.l.b16 %v210
      %v285 = vunpack.c.l.b16 %v211
      %v286 = vunpack.c.l.b16 %v212
      %v287 = vunpack.c.l.b16 %v213
      %v288 = vunpack.c.l.b16 %v214
      %v289 = vunpack.c.l.b16 %v215
      %v290 = vunpack.c.l.b16 %v216
      %v291 = vunpack.c.l.b16 %v217
      %v292 = vunpack.c.l.b16 %v218
      %v293 = vunpack.c.l.b16 %v219
      %v294 = vunpack.c.l.b16 %v220
      %v295 = vunpack.c.l.b16 %v221
      %v296 = vunpack.c.l.b16 %v222
      %v297 = vunpack.c.l.b16 %v223
      %v298 = vunpack.c.l.b16 %v224
      %v299 = vunpack.c.l.b16 %v225
      %v300 = vunpack.c.l.b16 %v226
      %v301 = vunpack.c.l.b16 %v227
      %v302 = vunpack.c.l.b16 %v228
      %v303 = vunpack.c.l.b16 %v229
      %v304 = vunpack.c.l.b16 %v230
      %v305 = vunpack.c.l.b16 %v231
      %v306 = vunpack.c.l.b16 %v232
      %v307 = vunpack.c.l.b16 %v233
      %v308 = vunpack.c.l.b16 %v234
      %v309 = vpack.c.b16 %v278, %v277
      %v310 = vpack.c.b16 %v280, %v279
      %v311 = vpack.c.b16 %v282, %v281
      %v312 = vpack.c.b16 %v284, %v283
      %v313 = vpack.c.b16 %v286, %v285
      %v314 = vpack.c.b16 %v288, %v287
      %v315 = vpack.c.b16 %v290, %v289
      %v316 = vpack.c.b16 %v292, %v291
      %v317 = vpack.c.b16 %v294, %v293
      %v318 = vpack.c.b16 %v296, %v295
      %v319 = vpack.c.b16 %v298, %v297
      %v320 = vpack.c.b16 %v300, %v299
      %v321 = vpack.c.b16 %v302, %v301
      %v322 = vpack.c.b16 %v304, %v303
      %v323 = vpack.c.b16 %v306, %v305
      %v324 = vpack.c.b16 %v308, %v307
      %341 = vmatprep.subr.bf16.mxu0 0
      %342 = vmatpush1.bf16.msra.mxu0 %v309
      %343 = vmatprep.subr.bf16.mxu0 0
      %344 = vmatpush1.bf16.msra.mxu0 %v310
      %345 = vmatprep.subr.bf16.mxu0 0
      %346 = vmatpush1.bf16.msra.mxu0 %v311
      %347 = vmatprep.subr.bf16.mxu0 0
      %348 = vmatpush1.bf16.msra.mxu0 %v312
      %349 = vmatprep.subr.bf16.mxu0 0
      %350 = vmatpush1.bf16.msra.mxu0 %v313
      %351 = vmatprep.subr.bf16.mxu0 0
      %352 = vmatpush1.bf16.msra.mxu0 %v314
      %353 = vmatprep.subr.bf16.mxu0 0
      %354 = vmatpush1.bf16.msra.mxu0 %v315
      %355 = vmatprep.subr.bf16.mxu0 0
      %356 = vmatpush1.bf16.msra.mxu0 %v316
      %357 = vmatprep.subr.bf16.mxu0 0
      %358 = vmatpush1.bf16.msra.mxu0 %v317
      %359 = vmatprep.subr.bf16.mxu0 0
      %360 = vmatpush1.bf16.msra.mxu0 %v318
      %361 = vmatprep.subr.bf16.mxu0 0
      %362 = vmatpush1.bf16.msra.mxu0 %v319
      %363 = vmatprep.subr.bf16.mxu0 0
      %364 = vmatpush1.bf16.msra.mxu0 %v320
      %365 = vmatprep.subr.bf16.mxu0 0
      %366 = vmatpush1.bf16.msra.mxu0 %v321
      %367 = vmatprep.subr.bf16.mxu0 0
      %368 = vmatpush1.bf16.msra.mxu0 %v322
      %369 = vmatprep.subr.bf16.mxu0 0
      %370 = vmatpush1.bf16.msra.mxu0 %v323
      %371 = vmatprep.subr.bf16.mxu0 0
      %372 = vmatpush1.bf16.msra.mxu0 %v324
      %373 = vmatprep.mubr.bf16.mxu0 %v242
      %374 = vmatmul.mubr.bf16.gmra.mrb[0].mxu0 %v241
      %v375 = vpop.f32.mrb[0].mxu0
      %v376 = vadd.f32 0.0, %v375
      %v377 = vpop.f32.mrb[0].mxu0
      %v378 = vpop.f32.mrb[0].mxu0
      %v379 = vadd.f32 0.0, %v378
      %v380 = vpop.f32.mrb[0].mxu0
      %381 = vdwg.mxu0
      %v382 = vld [vmem:[%s194] sm:$0xff]
      %v383 = vadd.f32 %v376, %v379
      %v384 = vadd.f32 %v382, %v383
      %385 = vst [vmem:[%s194] sm:$0xff] %v384
      %p386 = scmp.lt.s32.totalorder %s18, 1
      %s387 = scalar_select %p386, %s18, 1
      %p388 = scmp.lt.s32.totalorder %s19, 0
      %s389 = scalar_select %p388, %s19, 0
      %s390 = sadd.s32 %s389, %s387
      %s391 = smul.addr %s390, 8
      %s392 = scalar_lea.vmem %s2, %s391
      // Predicated region
      $region33: #{forward_features.1} parent=27 // pred_check
        %p393 = pneg %p103
      $region34: #{forward_features.1} parent=27 // pred_check_branch
        %395 = sbr.rel (%p393) target = $region36
      $region35: #{forward_features.1} parent=27 // pred_region
        _
      $region36: #{forward_features.1} parent=27 // pred_fallthru
        _
    $region28: #{forward_features.1} parent=5 // pred_fallthru
      _
    %p396 = scmp.le.s32.totalorder 2, %s8
    // Predicated region
    $region37: #{forward_features.1} parent=5 // pred_check
      %p397 = pneg %p396
    $region38: #{forward_features.1} parent=5 // pred_check_branch
      %399 = sbr.rel (%p397) target = $region40
    $region39: #{forward_features.1} parent=5 // pred_region
      %s400 = ssub.s32 %s8, 2
      // Predicated region
      $region41: #{forward_features.1} parent=39 // pred_check
        %p401 = pneg %p109
      $region42: #{forward_features.1} parent=39 // pred_check_branch
        %403 = sbr.rel (%p401) target = $region44
      $region43: #{forward_features.1} parent=39 // pred_region
        %p404 = scmp.lt.s32.totalorder %s21, 1
        %s405 = scalar_select %p404, %s21, 1
        %p406 = scmp.lt.s32.totalorder %s22, 0
        %s407 = scalar_select %p406, %s22, 0
        %s408 = sadd.s32 %s407, %s405
        %s409 = smul.addr %s408, 8
        %s410 = scalar_lea.vmem %s2, %s409
      $region44: #{forward_features.1} parent=39 // pred_fallthru
        _
    $region40: #{forward_features.1} parent=5 // pred_fallthru
      _
  $region6: #{forward_features.1} parent=0 // loop_footer
    %s12 = sadd.s32 1, %s8
  $region7: #{forward_features.1} parent=0 // loop_footer_branch
    %7 = sbr.rel target = $region3
  $region8: #{forward_features.1} parent=0 // loop_exit
    _

</llo_original>
